<compile_context>
chip_gen: v5e
topology: v5e:2x2
jax: 0.10.0
libtpu: 0.0.40
codegen_flags: <defaults>
</compile_context>

<pallas_src>
import jax
import jax.numpy as jnp
from jax import lax
from jax.experimental import pallas as pl
from jax.experimental.pallas import tpu as pltpu

_MIB = 1024 * 1024


# ----------------------------------------------------------------------------
# Pallas kernel: DeepPoly interval propagation through y = x @ W.T + b.
# Inputs: lb/ub tiles (tm, tk); W tile in canonical (K, N) layout (tk, tn);
# bias tile (1, tn).  Outputs lo/uo tiles (tm, tn).  f32 VMEM accumulators.
# ----------------------------------------------------------------------------
def _dp_linear_resolve_kernel(lb_ref, ub_ref, w_ref, b_ref,   # inputs
                              lo_ref, uo_ref,                 # outputs
                              y_acc, d_acc):                  # scratch
    k = pl.program_id(2)

    @pl.when(k == 0)
    def _():
        y_acc[...] = jnp.zeros_like(y_acc)
        d_acc[...] = jnp.zeros_like(d_acc)

    lb = lb_ref[...]                                # (tm, tk) f32
    ub = ub_ref[...]                                # (tm, tk) f32
    # Upcast before abs/matmul (no-op for f32 weights; needed for bf16 weights,
    # and v5e has no bf16 VPU anyway).
    W = w_ref[...].astype(jnp.float32)              # (tk, tn) canonical (K, N)

    c = (lb + ub) * 0.5
    r = (ub - lb) * 0.5

    # Canonical (M,K)x(K,N) contraction -> no transpose on the MXU feed path.
    dn = (((1,), (0,)), ((), ()))
    y_acc[...] += lax.dot_general(c, W, dimension_numbers=dn,
                                  preferred_element_type=jnp.float32)
    d_acc[...] += lax.dot_general(r, jnp.abs(W), dimension_numbers=dn,
                                  preferred_element_type=jnp.float32)

    @pl.when(k == pl.num_programs(2) - 1)
    def _():
        bias = b_ref[...]                           # (1, tn) -> broadcast over tm
        y = y_acc[...]
        d = d_acc[...]
        lo_ref[...] = (y - d + bias).astype(lo_ref.dtype)
        uo_ref[...] = (y + d + bias).astype(uo_ref.dtype)


# ----------------------------------------------------------------------------
# Planning helpers (tile sizes, per-generation VMEM limits, weight caching).
# ----------------------------------------------------------------------------
def _round_up(x: int, m: int) -> int:
    return (x + m - 1) // m * m


def _vmem_capacity_bytes() -> int:
    try:
        return int(pltpu.get_tpu_info().vmem_capacity_bytes)
    except Exception:
        try:
            kind = jax.devices()[0].device_kind.lower()
        except Exception:
            kind = ""
        if "v5" in kind or "v6" in kind:
            return 128 * _MIB
        return 64 * _MIB   # conservative: v7x has 64 MiB VMEM per TensorCore


def _supports_buffered() -> bool:
    if not hasattr(pl, "Buffered"):
        return False
    try:
        pl.BlockSpec((8, 128), lambda i: (i, 0), pipeline_mode=pl.Buffered(3))
        return True
    except Exception:
        return False


_HAS_BUFFERED = _supports_buffered()


def _pick_tile(extent: int, align: int, cap: int):
    """Tile size (multiple of `align`, <= cap) minimizing padded extent;
    ties broken toward the largest tile."""
    extent = max(int(extent), 1)
    best_t, best_padded = align, _round_up(extent, align)
    for t in range(align, cap + 1, align):
        padded = _round_up(extent, t)
        if padded < best_padded or (padded == best_padded and t > best_t):
            best_t, best_padded = t, padded
    return best_t, best_padded


def _dp_linear_plan(out_f: int, in_f: int, *, cap_n=None, cap_k=None):
    cap_bytes = _vmem_capacity_bytes()
    big_vmem = cap_bytes >= 96 * _MIB          # v5e / v6e class (128 MiB)
    if cap_n is None:
        cap_n = 512
    if cap_k is None:
        cap_k = 2048 if big_vmem else 1024     # keep v7x tiles ~18-32 MiB live
    vmem_limit = (100 * _MIB) if big_vmem else (56 * _MIB)

    tn, out_p = _pick_tile(out_f, 128, cap_n)
    tk, in_p = _pick_tile(in_f, 128, cap_k)
    return dict(tn=tn, tk=tk, out_p=out_p, in_p=in_p, vmem_limit=vmem_limit)


def dp_linear_prepare(weight, bias, *, weight_dtype=jnp.float32,
                      cap_n=None, cap_k=None):
    """One-time weight/bias prep: pad, transpose to canonical (K, N), cast.

    Done once (e.g. at layer construction) so the per-call hot path never
    touches W in HBM outside the kernel itself.
    """
    out_f, in_f = weight.shape
    plan = _dp_linear_plan(out_f, in_f, cap_n=cap_n, cap_k=cap_k)
    out_p, in_p = plan["out_p"], plan["in_p"]

    w = weight.astype(weight_dtype)
    # Zero padding is exact: padded input columns multiply zero weight columns,
    # padded output columns get bias 0 and are sliced off.
    wT_p = jnp.pad(w, ((0, out_p - out_f), (0, in_p - in_f))).T   # (in_p, out_p)
    b_p = jnp.pad(bias.astype(jnp.float32), (0, out_p - out_f)).reshape(1, out_p)
    return wT_p, b_p, plan


def dp_linear_resolve_prepared(lbounds, ubounds, wT_p, b_p, out_f, plan):
    """Concrete bound propagation through y = x @ W.T + b (DeepPoly resolve),
    using a cached padded/(K,N)-laid-out weight."""
    B, in_f = lbounds.shape
    in_p, out_p = wT_p.shape
    assert in_f <= in_p and out_f <= out_p
    tn, tk = plan["tn"], plan["tk"]

    lbounds = lbounds.astype(jnp.float32)
    ubounds = ubounds.astype(jnp.float32)

    # Batch tile: multiple of 8, <= 512, minimizing padding.
    tm, B_p = _pick_tile(B, 8, 512)

    if (B_p, in_p) != (B, in_f):
        lb_p = jnp.pad(lbounds, ((0, B_p - B), (0, in_p - in_f)))
        ub_p = jnp.pad(ubounds, ((0, B_p - B), (0, in_p - in_f)))
    else:                                   # skip the pad round-trip entirely
        lb_p, ub_p = lbounds, ubounds

    n_i, n_j, n_k = B_p // tm, out_p // tn, in_p // tk

    # Megacore (v7x has 2 TensorCores): ensure >= 2 parallel iterations when
    # the whole output would otherwise be a single (i, j) tile.
    if n_i * n_j == 1 and out_p >= 256:
        cand = (out_p // 2) // 128 * 128
        while cand >= 128:
            if out_p % cand == 0:
                tn = cand
                n_j = out_p // tn
                break
            cand -= 128

    grid = (n_i, n_j, n_k)
    total_steps = n_i * n_j * n_k

    # 3-deep buffering on the streamed inputs hides DMA latency in the
    # skinny-M / memory-bound regime; only when there are enough grid steps.
    use_buffered = _HAS_BUFFERED and total_steps >= 3

    def _in_spec(shape, imap):
        if use_buffered:
            return pl.BlockSpec(shape, imap, pipeline_mode=pl.Buffered(3))
        return pl.BlockSpec(shape, imap)

    in_specs = [
        _in_spec((tm, tk), lambda i, j, k: (i, k)),    # lbounds
        _in_spec((tm, tk), lambda i, j, k: (i, k)),    # ubounds
        _in_spec((tk, tn), lambda i, j, k: (k, j)),    # weight, canonical (K, N)
        pl.BlockSpec((1, tn), lambda i, j, k: (0, j)),  # bias (tiny)
    ]
    out_specs = (
        pl.BlockSpec((tm, tn), lambda i, j, k: (i, j)),
        pl.BlockSpec((tm, tn), lambda i, j, k: (i, j)),
    )
    out_shape = (
        jax.ShapeDtypeStruct((B_p, out_p), jnp.float32),
        jax.ShapeDtypeStruct((B_p, out_p), jnp.float32),
    )

    # Cost estimate including grid re-reads: lb/ub streamed once per j-tile,
    # W once per i-tile.
    w_item = jnp.dtype(wT_p.dtype).itemsize
    flops = 2 * 2 * B_p * in_p * out_p
    bytes_accessed = (
        4 * 2 * B_p * in_p * n_j          # lb + ub, re-read per j-tile
        + w_item * in_p * out_p * n_i     # W, re-read per i-tile
        + 4 * out_p * n_i                 # bias
        + 4 * 2 * B_p * out_p             # lo + uo writeback
    )

    lo, uo = pl.pallas_call(
        _dp_linear_resolve_kernel,
        out_shape=out_shape,
        grid_spec=pltpu.PrefetchScalarGridSpec(
            num_scalar_prefetch=0,
            grid=grid,
            in_specs=in_specs,
            out_specs=out_specs,
            scratch_shapes=[
                pltpu.VMEM((tm, tn), jnp.float32),   # y accumulator (center)
                pltpu.VMEM((tm, tn), jnp.float32),   # d accumulator (radius)
            ],
        ),
        compiler_params=pltpu.CompilerParams(
            dimension_semantics=("parallel", "parallel", "arbitrary"),
            vmem_limit_bytes=plan["vmem_limit"],
        ),
        cost_estimate=pl.CostEstimate(
            flops=flops, transcendentals=0, bytes_accessed=bytes_accessed),
    )(lb_p, ub_p, wT_p, b_p)

    if (B_p, out_p) == (B, out_f):          # no padding -> no slice round-trip
        return lo, uo
    return lo[:B, :out_f], uo[:B, :out_f]


def dp_linear_resolve(lbounds, ubounds, weight, bias, *, weight_dtype=jnp.float32,
                      cap_n=None, cap_k=None):
    """Convenience wrapper (un-cached): prepare weights then resolve."""
    wT_p, b_p, plan = dp_linear_prepare(weight, bias, weight_dtype=weight_dtype,
                                        cap_n=cap_n, cap_k=cap_k)
    return dp_linear_resolve_prepared(lbounds, ubounds, wT_p, b_p,
                                      weight.shape[0], plan)


# ----------------------------------------------------------------------------
# JAX analogs of DP_Shape / DP_Linear (glue; no hot-path compute here).
# ----------------------------------------------------------------------------
class DPShape:
    def __init__(self, lbounds=None, ubounds=None):
        self.parent = None
        self._lbounds = lbounds
        self._ubounds = ubounds
        self.transform = None
        self._prepared = None

    @classmethod
    def from_transform(cls, parent, ineql, biasl, inequ, biasu, prepared=None):
        self = cls()
        self.parent = parent
        self.transform = (ineql, biasl, inequ, biasu)
        self._prepared = prepared
        return self

    @classmethod
    def from_eps(cls, inputs, eps, clamp):
        lo, hi = clamp
        lb = jnp.clip(inputs - eps, lo, hi)
        ub = jnp.clip(inputs + eps, lo, hi)
        return cls(lb, ub)

    @property
    def lbounds(self):
        assert self._lbounds is not None
        return self._lbounds

    @property
    def ubounds(self):
        assert self._ubounds is not None
        return self._ubounds

    def backsub(self):
        if self._lbounds is not None and self._ubounds is not None:
            return
        root = self.parent
        # TODO(synk): multi-layer back-substitution chaining (the while-loop in
        # DP_Shape.backsub) is plain affine-map composition; only the single
        # resolve-against-root step is implemented as a Pallas kernel here.
        assert root.transform is None, "only single-layer backsub implemented"
        ineql, biasl, inequ, biasu = self.transform
        # For DP_Linear: ineql == inequ == W and biasl == biasu == b, so one
        # center/radius resolve covers both bound expressions exactly.
        if self._prepared is not None:
            wT_p, b_p, plan, out_f = self._prepared
        else:
            wT_p, b_p, plan = dp_linear_prepare(ineql, biasl)
            out_f = ineql.shape[0]
        lo, uo = dp_linear_resolve_prepared(root.lbounds, root.ubounds,
                                            wT_p, b_p, out_f, plan)
        self._lbounds = lo
        self._ubounds = uo


class DPLinear:
    """JAX/Pallas analog of DP_Linear(nn.Linear)."""

    def __init__(self, weight, bias, *, weight_dtype=jnp.float32):
        self.out_features, self.in_features = weight.shape
        self.weight = weight
        self.bias = bias
        # Weight padding + canonical (K, N) layout + bias padding hoisted here:
        # done once, reused by every resolve.
        self._wT_p, self._b_p, self._plan = dp_linear_prepare(
            weight, bias, weight_dtype=weight_dtype)

    def __call__(self, in_shape: DPShape) -> DPShape:
        W, b = self.weight, self.bias
        return DPShape.from_transform(
            in_shape, W, b, W, b,
            prepared=(self._wT_p, self._b_p, self._plan, self.out_features))


# ----------------------------------------------------------------------------
# Demo / self-test
# ----------------------------------------------------------------------------
if __name__ == "__main__":
    key = jax.random.PRNGKey(0)
    k_x, k_w, k_b = jax.random.split(key, 3)

    batch, in_features, out_features = 2, 32, 16

    # Deterministic "nn.Linear"-style parameters.
    bound = 1.0 / (in_features ** 0.5)
    weight = jax.random.uniform(
        k_w, (out_features, in_features), jnp.float32, -bound, bound)
    bias = jax.random.uniform(
        k_b, (out_features,), jnp.float32, -bound, bound)

    x = jax.random.uniform(k_x, (batch, in_features), jnp.float32)
    eps = jnp.float32(0.1)

    root = DPShape.from_eps(x, eps, (0.0, 1.0))
    layer = DPLinear(weight, bias)
    out_shape = layer(root)      # DP_Linear.forward: symbolic transform
    out_shape.backsub()          # resolve bounds via the Pallas kernel

    lo = jax.block_until_ready(out_shape.lbounds)
    uo = jax.block_until_ready(out_shape.ubounds)

    # Pure-JAX reference check of the resolve semantics (original 4-matmul form).
    Wp = jnp.maximum(weight, 0.0)
    Wn = jnp.minimum(weight, 0.0)
    ref_lo = root.lbounds @ Wp.T + root.ubounds @ Wn.T + bias
    ref_uo = root.ubounds @ Wp.T + root.lbounds @ Wn.T + bias
    assert lo.shape == (batch, out_features) and uo.shape == (batch, out_features)
    assert jnp.allclose(lo, ref_lo, atol=1e-4, rtol=1e-5), "lower bounds mismatch"
    assert jnp.allclose(uo, ref_uo, atol=1e-4, rtol=1e-5), "upper bounds mismatch"
    assert bool(jnp.all(lo <= uo)), "invalid DeepPoly box"

    # Second check with forced small tiles so the multi-tile grid, K-accumulator
    # init/finalize and (when available) 3-deep input buffering are exercised.
    k2 = jax.random.PRNGKey(1)
    k_x2, k_w2, k_b2 = jax.random.split(k2, 3)
    B2, IN2, OUT2 = 96, 384, 320
    w2 = jax.random.uniform(k_w2, (OUT2, IN2), jnp.float32, -0.05, 0.05)
    b2 = jax.random.uniform(k_b2, (OUT2,), jnp.float32, -0.05, 0.05)
    x2 = jax.random.uniform(k_x2, (B2, IN2), jnp.float32)
    lb2 = jnp.clip(x2 - 0.05, 0.0, 1.0)
    ub2 = jnp.clip(x2 + 0.05, 0.0, 1.0)
    lo2, uo2 = dp_linear_resolve(lb2, ub2, w2, b2, cap_n=128, cap_k=128)
    lo2 = jax.block_until_ready(lo2)
    uo2 = jax.block_until_ready(uo2)
    Wp2 = jnp.maximum(w2, 0.0)
    Wn2 = jnp.minimum(w2, 0.0)
    ref_lo2 = lb2 @ Wp2.T + ub2 @ Wn2.T + b2
    ref_uo2 = ub2 @ Wp2.T + lb2 @ Wn2.T + b2
    assert jnp.allclose(lo2, ref_lo2, atol=1e-3, rtol=1e-4), "tiled lower mismatch"
    assert jnp.allclose(uo2, ref_uo2, atol=1e-3, rtol=1e-4), "tiled upper mismatch"
    assert bool(jnp.all(lo2 <= uo2)), "invalid DeepPoly box (tiled)"

    print("KERNEL_OK")
</pallas_src>

<mosaic_0001>
module attributes {stable_mosaic.version = 11 : i64} {
  func.func @_dp_linear_resolve_kernel(%arg0: i32, %arg1: i32, %arg2: i32, %arg3: memref<8x128xf32, #tpu.memory_space<vmem>>, %arg4: memref<8x128xf32, #tpu.memory_space<vmem>>, %arg5: memref<128x128xf32, #tpu.memory_space<vmem>>, %arg6: memref<1x128xf32, #tpu.memory_space<vmem>>, %arg7: memref<8x128xf32, #tpu.memory_space<vmem>>, %arg8: memref<8x128xf32, #tpu.memory_space<vmem>>, %arg9: memref<8x128xf32, #tpu.memory_space<vmem>>, %arg10: memref<8x128xf32, #tpu.memory_space<vmem>>) attributes {dimension_semantics = [#tpu.dimension_semantics<parallel>, #tpu.dimension_semantics<parallel>, #tpu.dimension_semantics<arbitrary>], iteration_bounds = array<i64: 1, 1, 1>, scalar_prefetch = 0 : i64, scratch_operands = 2 : i64, tpu.core_type = #tpu.core_type<tc>, window_params = [{transform_indices = @transform_0, window_bounds = array<i64: 8, 128>}, {transform_indices = @transform_1, window_bounds = array<i64: 8, 128>}, {transform_indices = @transform_2, window_bounds = array<i64: 128, 128>}, {transform_indices = @transform_3, window_bounds = array<i64: 1, 128>}, {transform_indices = @transform_4, window_bounds = array<i64: 8, 128>}, {transform_indices = @transform_5, window_bounds = array<i64: 8, 128>}]} {
    %c0_i32 = arith.constant 0 : i32
    %0 = arith.cmpi eq, %arg2, %c0_i32 : i32
    %1 = arith.extui %0 : i1 to i32
    %c0_i32_0 = arith.constant 0 : i32
    %2 = arith.cmpi ne, %1, %c0_i32_0 : i32
    scf.if %2 {
      %cst_19 = arith.constant 0.000000e+00 : f32
      %24 = vector.broadcast %cst_19 : f32 to vector<8x128xf32>
      %c0_20 = arith.constant 0 : index
      %c0_21 = arith.constant 0 : index
      %25 = vector.load %arg9[%c0_20, %c0_21] : memref<8x128xf32, #tpu.memory_space<vmem>>, vector<8x128xf32>
      tpu.vector_store %arg9[%c0_20, %c0_21], %24 {strides = array<i32>} : memref<8x128xf32, #tpu.memory_space<vmem>>, vector<8x128xf32>,
      %cst_22 = arith.constant 0.000000e+00 : f32
      %26 = vector.broadcast %cst_22 : f32 to vector<8x128xf32>
      %c0_23 = arith.constant 0 : index
      %c0_24 = arith.constant 0 : index
      %27 = vector.load %arg10[%c0_23, %c0_24] : memref<8x128xf32, #tpu.memory_space<vmem>>, vector<8x128xf32>
      tpu.vector_store %arg10[%c0_23, %c0_24], %26 {strides = array<i32>} : memref<8x128xf32, #tpu.memory_space<vmem>>, vector<8x128xf32>,
    } else {
    }
    %c0 = arith.constant 0 : index
    %c0_1 = arith.constant 0 : index
    %3 = vector.load %arg3[%c0, %c0_1] : memref<8x128xf32, #tpu.memory_space<vmem>>, vector<8x128xf32>
    %c0_2 = arith.constant 0 : index
    %c0_3 = arith.constant 0 : index
    %4 = vector.load %arg4[%c0_2, %c0_3] : memref<8x128xf32, #tpu.memory_space<vmem>>, vector<8x128xf32>
    %c0_4 = arith.constant 0 : index
    %c0_5 = arith.constant 0 : index
    %5 = vector.load %arg5[%c0_4, %c0_5] : memref<128x128xf32, #tpu.memory_space<vmem>>, vector<128x128xf32>
    %6 = arith.addf %3, %4 : vector<8x128xf32>
    %cst = arith.constant 5.000000e-01 : f32
    %7 = vector.broadcast %cst : f32 to vector<8x128xf32>
    %8 = arith.mulf %6, %7 : vector<8x128xf32>
    %9 = arith.subf %4, %3 : vector<8x128xf32>
    %cst_6 = arith.constant 5.000000e-01 : f32
    %10 = vector.broadcast %cst_6 : f32 to vector<8x128xf32>
    %11 = arith.mulf %9, %10 : vector<8x128xf32>
    %c0_7 = arith.constant 0 : index
    %c0_8 = arith.constant 0 : index
    %12 = vector.load %arg9[%c0_7, %c0_8] : memref<8x128xf32, #tpu.memory_space<vmem>>, vector<8x128xf32>
    %cst_9 = arith.constant dense<0.000000e+00> : vector<8x128xf32>
    %13 = tpu.matmul %8, %5, %cst_9 {dimension_numbers = #tpu.dot_dimension_numbers<[1], [0], [0], [1], [0, 0, 1, 1], [], []>} : vector<8x128xf32>, vector<128x128xf32>, vector<8x128xf32> -> vector<8x128xf32>
    %14 = arith.addf %12, %13 : vector<8x128xf32>
    %c0_10 = arith.constant 0 : index
    %c0_11 = arith.constant 0 : index
    %15 = vector.load %arg9[%c0_10, %c0_11] : memref<8x128xf32, #tpu.memory_space<vmem>>, vector<8x128xf32>
    tpu.vector_store %arg9[%c0_10, %c0_11], %14 {strides = array<i32>} : memref<8x128xf32, #tpu.memory_space<vmem>>, vector<8x128xf32>,
    %c0_12 = arith.constant 0 : index
    %c0_13 = arith.constant 0 : index
    %16 = vector.load %arg10[%c0_12, %c0_13] : memref<8x128xf32, #tpu.memory_space<vmem>>, vector<8x128xf32>
    %17 = math.absf %5 : vector<128x128xf32>
    %cst_14 = arith.constant dense<0.000000e+00> : vector<8x128xf32>
    %18 = tpu.matmul %11, %17, %cst_14 {dimension_numbers = #tpu.dot_dimension_numbers<[1], [0], [0], [1], [0, 0, 1, 1], [], []>} : vector<8x128xf32>, vector<128x128xf32>, vector<8x128xf32> -> vector<8x128xf32>
    %19 = arith.addf %16, %18 : vector<8x128xf32>
    %c0_15 = arith.constant 0 : index
    %c0_16 = arith.constant 0 : index
    %20 = vector.load %arg10[%c0_15, %c0_16] : memref<8x128xf32, #tpu.memory_space<vmem>>, vector<8x128xf32>
    tpu.vector_store %arg10[%c0_15, %c0_16], %19 {strides = array<i32>} : memref<8x128xf32, #tpu.memory_space<vmem>>, vector<8x128xf32>,
    %c0_i32_17 = arith.constant 0 : i32
    %21 = arith.cmpi eq, %arg2, %c0_i32_17 : i32
    %22 = arith.extui %21 : i1 to i32
    %c0_i32_18 = arith.constant 0 : i32
    %23 = arith.cmpi ne, %22, %c0_i32_18 : i32
    scf.if %23 {
      %c0_19 = arith.constant 0 : index
      %c0_20 = arith.constant 0 : index
      %24 = vector.load %arg6[%c0_19, %c0_20] : memref<1x128xf32, #tpu.memory_space<vmem>>, vector<1x128xf32>
      %c0_21 = arith.constant 0 : index
      %c0_22 = arith.constant 0 : index
      %25 = vector.load %arg9[%c0_21, %c0_22] : memref<8x128xf32, #tpu.memory_space<vmem>>, vector<8x128xf32>
      %c0_23 = arith.constant 0 : index
      %c0_24 = arith.constant 0 : index
      %26 = vector.load %arg10[%c0_23, %c0_24] : memref<8x128xf32, #tpu.memory_space<vmem>>, vector<8x128xf32>
      %27 = arith.subf %25, %26 : vector<8x128xf32>
      %28 = vector.broadcast %24 : vector<1x128xf32> to vector<8x128xf32>
      %29 = arith.addf %27, %28 : vector<8x128xf32>
      %c0_25 = arith.constant 0 : index
      %c0_26 = arith.constant 0 : index
      %30 = vector.load %arg7[%c0_25, %c0_26] : memref<8x128xf32, #tpu.memory_space<vmem>>, vector<8x128xf32>
      tpu.vector_store %arg7[%c0_25, %c0_26], %29 {strides = array<i32>} : memref<8x128xf32, #tpu.memory_space<vmem>>, vector<8x128xf32>,
      %31 = arith.addf %25, %26 : vector<8x128xf32>
      %32 = vector.broadcast %24 : vector<1x128xf32> to vector<8x128xf32>
      %33 = arith.addf %31, %32 : vector<8x128xf32>
      %c0_27 = arith.constant 0 : index
      %c0_28 = arith.constant 0 : index
      %34 = vector.load %arg8[%c0_27, %c0_28] : memref<8x128xf32, #tpu.memory_space<vmem>>, vector<8x128xf32>
      tpu.vector_store %arg8[%c0_27, %c0_28], %33 {strides = array<i32>} : memref<8x128xf32, #tpu.memory_space<vmem>>, vector<8x128xf32>,
    } else {
    }
    return
  }
  func.func @transform_0(%arg0: i32, %arg1: i32, %arg2: i32) -> (i32, i32) {
    %c0_i32 = arith.constant 0 : i32
    return %arg0, %arg2 : i32, i32
  }
  func.func @transform_1(%arg0: i32, %arg1: i32, %arg2: i32) -> (i32, i32) {
    %c0_i32 = arith.constant 0 : i32
    return %arg0, %arg2 : i32, i32
  }
  func.func @transform_2(%arg0: i32, %arg1: i32, %arg2: i32) -> (i32, i32) {
    %c0_i32 = arith.constant 0 : i32
    return %arg2, %arg1 : i32, i32
  }
  func.func @transform_3(%arg0: i32, %arg1: i32, %arg2: i32) -> (i32, i32) {
    %c0_i32 = arith.constant 0 : i32
    %c0_i32_0 = arith.constant 0 : i32
    return %c0_i32, %arg1 : i32, i32
  }
  func.func @transform_4(%arg0: i32, %arg1: i32, %arg2: i32) -> (i32, i32) {
    %c0_i32 = arith.constant 0 : i32
    return %arg0, %arg1 : i32, i32
  }
  func.func @transform_5(%arg0: i32, %arg1: i32, %arg2: i32) -> (i32, i32) {
    %c0_i32 = arith.constant 0 : i32
    return %arg0, %arg1 : i32, i32
  }
}

</mosaic_0001>

<llo_original>
// kernel: tpu_custom_call.1
$region0: #{tpu_custom_call.1}
  #allocation0 [shape = 'u32[]', space=smem, size = 0x4, offset = 0x4, fixed_abs, tag = 'smem constant byte address 0x4 - core index']
  #allocation1 [shape = 'u32[72,128]{1,0:T(1,128)}', space=vmem, size = 0x9000, scoped, tag = 'internal scratch']
  #allocation2 [shape = 'f32[8,128]{1,0:T(8,128)}', space=vmem, size = 0x1000, scoped, tag = 'scratch operand']
  #allocation3 [shape = 'f32[8,128]{1,0:T(8,128)}', space=vmem, size = 0x1000, scoped, tag = 'scratch operand']
  %s0 = inlined_call_operand.hbm [shape: f32[8,128], index: 0, kind: input, shape index: {}]
  %s1 = inlined_call_operand.hbm [shape: f32[8,128], index: 1, kind: input, shape index: {}]
  %s2 = inlined_call_operand.hbm [shape: f32[128,128], index: 2, kind: input, shape index: {}]
  %s3 = inlined_call_operand.vmem [shape: f32[1,128], index: 3, kind: input, shape index: {}]
  %s4 = inlined_call_operand.hbm [shape: f32[8,128], index: 4, kind: output, shape index: {0}]
  %s5 = inlined_call_operand.hbm [shape: f32[8,128], index: 5, kind: output, shape index: {1}]
  %6 = xla_tuple %s4, %s5
  %s7 = sld [smem:[#allocation0]]
  $region54: #{tpu_custom_call.1} parent=0
    _
  %s9 = ssub.s32 1, %s7
  %s10 = scalar_select 0, %s9, %s7
  $region1: #{tpu_custom_call.1} parent=0
    #allocation4 [shape = 'u8[4096]{0}', space=vmem, size = 0x1000, scoped, tag = 'input window, operand 0, single buffered']
    #allocation5 [shape = 's32[1]{0}', space=sflag, size = 0x4, scoped, tag = 'scoped memory for tpu_custom_call.1']
    #allocation6 [shape = 's32[1]{0}', space=sflag, size = 0x4, scoped, tag = 'scoped memory for tpu_custom_call.1']
    #allocation7 [shape = 'u8[4096]{0}', space=vmem, size = 0x1000, scoped, tag = 'input window, operand 1, single buffered']
    #allocation8 [shape = 's32[1]{0}', space=sflag, size = 0x4, scoped, tag = 'scoped memory for tpu_custom_call.1']
    #allocation9 [shape = 'u8[65536]{0}', space=vmem, size = 0x10000, scoped, tag = 'input window, operand 2, single buffered']
    #allocation10 [shape = 'u8[4096]{0}', space=vmem, size = 0x1000, scoped, tag = 'output window, operand 0, single buffered']
    #allocation11 [shape = 'u8[4096]{0}', space=vmem, size = 0x1000, scoped, tag = 'output window, operand 1, single buffered']
    #allocation12 [shape = 's32[1]{0}', space=sflag, size = 0x4, scoped, tag = 'scoped memory for tpu_custom_call.1']
    %11 = vsyncpa [#allocation5], 0
    %12 = vsyncpa [#allocation8], 0
    %13 = vsyncpa [#allocation6], 0
    %14 = vsyncpa [#allocation12], 0
    // Predicated region
    $region2: #{tpu_custom_call.1} parent=1 // pred_check
      _
    $region3: #{tpu_custom_call.1} parent=1 // pred_check_branch
      %16 = sbr.rel (0) target = $region5
    $region4: #{tpu_custom_call.1} parent=1 // pred_region
      %18 = vsyncadd [#allocation5], 0
      %s20 = sshll.u32 %s0, 4
      %s21 = int_to_ptr.hbm [resolvable:$true] %s20
      %s22 = sshll.u32 [#allocation4], 4
      %s23 = int_to_ptr.vmem [resolvable:$true] %s22
      %25 = dma.hbm_to_vmem [thread:$0]  %s21, 128, %s23, [#allocation5]
    $region5: #{tpu_custom_call.1} parent=1 // pred_fallthru
      _
    // Predicated region
    $region6: #{tpu_custom_call.1} parent=1 // pred_check
      _
    $region7: #{tpu_custom_call.1} parent=1 // pred_check_branch
      %27 = sbr.rel (0) target = $region9
    $region8: #{tpu_custom_call.1} parent=1 // pred_region
      %29 = vsyncadd [#allocation8], 0
      %s31 = sshll.u32 %s1, 4
      %s32 = int_to_ptr.hbm [resolvable:$true] %s31
      %s33 = sshll.u32 [#allocation7], 4
      %s34 = int_to_ptr.vmem [resolvable:$true] %s33
      %36 = dma.hbm_to_vmem [thread:$0]  %s32, 128, %s34, [#allocation8]
    $region9: #{tpu_custom_call.1} parent=1 // pred_fallthru
      _
    // Predicated region
    $region10: #{tpu_custom_call.1} parent=1 // pred_check
      _
    $region11: #{tpu_custom_call.1} parent=1 // pred_check_branch
      %38 = sbr.rel (0) target = $region13
    $region12: #{tpu_custom_call.1} parent=1 // pred_region
      %40 = vsyncadd [#allocation8], 0
      %s41 = sshll.u32 %s2, 4
      %s42 = int_to_ptr.hbm [resolvable:$true] %s41
      %s43 = sshll.u32 [#allocation9], 4
      %s44 = int_to_ptr.vmem [resolvable:$true] %s43
      %49 = dma.hbm_to_vmem [thread:$0]  %s42, 2048, %s44, [#allocation8], 128, 128, 8
    $region13: #{tpu_custom_call.1} parent=1 // pred_fallthru
      _
    // Predicated region
    $region14: #{tpu_custom_call.1} parent=1 // pred_check
      _
    $region15: #{tpu_custom_call.1} parent=1 // pred_check_branch
      %51 = sbr.rel (0) target = $region17
    $region16: #{tpu_custom_call.1} parent=1 // pred_region
      _
    $region17: #{tpu_custom_call.1} parent=1 // pred_fallthru
      _
    // Predicated region
    $region18: #{tpu_custom_call.1} parent=1 // pred_check
      _
    $region19: #{tpu_custom_call.1} parent=1 // pred_check_branch
      %53 = sbr.rel (0) target = $region21
    $region20: #{tpu_custom_call.1} parent=1 // pred_region
      %55 = dma.done [#allocation5], 128
    $region21: #{tpu_custom_call.1} parent=1 // pred_fallthru
      _
    // Predicated region
    $region22: #{tpu_custom_call.1} parent=1 // pred_check
      _
    $region23: #{tpu_custom_call.1} parent=1 // pred_check_branch
      %57 = sbr.rel (0) target = $region25
    $region24: #{tpu_custom_call.1} parent=1 // pred_region
      %59 = dma.done [#allocation8], 128
    $region25: #{tpu_custom_call.1} parent=1 // pred_fallthru
      _
    // Predicated region
    $region26: #{tpu_custom_call.1} parent=1 // pred_check
      _
    $region27: #{tpu_custom_call.1} parent=1 // pred_check_branch
      %61 = sbr.rel (0) target = $region29
    $region28: #{tpu_custom_call.1} parent=1 // pred_region
      %63 = dma.done [#allocation8], 2048
    $region29: #{tpu_custom_call.1} parent=1 // pred_fallthru
      _
    %p64 = scmp.eq.s32.totalorder 0, 0
    // Predicated region
    $region30: #{tpu_custom_call.1} parent=1 // pred_check
      %p65 = pneg %p64
    $region31: #{tpu_custom_call.1} parent=1 // pred_check_branch
      %67 = sbr.rel (%p65) target = $region33
    $region32: #{tpu_custom_call.1} parent=1 // pred_region
      %68 = vst [vmem:[#allocation2] sm:$0xff] 0.0
      %69 = vst [vmem:[#allocation3] sm:$0xff] 0.0
    $region33: #{tpu_custom_call.1} parent=1 // pred_fallthru
      _
    %v70 = vld [vmem:[#allocation4] sm:$0xff]
    %v71 = vld [vmem:[#allocation7] sm:$0xff]
    %v72 = vld [vmem:[#allocation9] sm:$0xff]
    %v73 = vld [vmem:[#allocation9 + $0x8] sm:$0xff]
    %v74 = vld [vmem:[#allocation9 + $0x10] sm:$0xff]
    %v75 = vld [vmem:[#allocation9 + $0x18] sm:$0xff]
    %v76 = vld [vmem:[#allocation9 + $0x20] sm:$0xff]
    %v77 = vld [vmem:[#allocation9 + $0x28] sm:$0xff]
    %v78 = vld [vmem:[#allocation9 + $0x30] sm:$0xff]
    %v79 = vld [vmem:[#allocation9 + $0x38] sm:$0xff]
    %v80 = vld [vmem:[#allocation9 + $0x40] sm:$0xff]
    %v81 = vld [vmem:[#allocation9 + $0x48] sm:$0xff]
    %v82 = vld [vmem:[#allocation9 + $0x50] sm:$0xff]
    %v83 = vld [vmem:[#allocation9 + $0x58] sm:$0xff]
    %v84 = vld [vmem:[#allocation9 + $0x60] sm:$0xff]
    %v85 = vld [vmem:[#allocation9 + $0x68] sm:$0xff]
    %v86 = vld [vmem:[#allocation9 + $0x70] sm:$0xff]
    %v87 = vld [vmem:[#allocation9 + $0x78] sm:$0xff]
    %v88 = vadd.f32 %v70, %v71
    %v89 = vmul.f32 %v88, 0.5
    %v90 = vsub.f32 %v71, %v70
    %v91 = vmul.f32 %v90, 0.5
    %v92 = vld [vmem:[#allocation2] sm:$0xff]
    %93 = vmatpush.msra.mxu0 %v87
    %94 = vmatpush.msra.mxu0 %v86
    %95 = vmatpush.msra.mxu0 %v85
    %96 = vmatpush.msra.mxu0 %v84
    %97 = vmatpush.msra.mxu0 %v83
    %98 = vmatpush.msra.mxu0 %v82
    %99 = vmatpush.msra.mxu0 %v81
    %100 = vmatpush.msra.mxu0 %v80
    %101 = vmatpush.msra.mxu0 %v79
    %102 = vmatpush.msra.mxu0 %v78
    %103 = vmatpush.msra.mxu0 %v77
    %104 = vmatpush.msra.mxu0 %v76
    %105 = vmatpush.msra.mxu0 %v75
    %106 = vmatpush.msra.mxu0 %v74
    %107 = vmatpush.msra.mxu0 %v73
    %108 = vmatpush.msra.mxu0 %v72
    %109 = vmatmul.f32.gmra.mxu0 %v89
    %v110 = vpop.f32.mrf.mxu0
    %v111 = vadd.f32 0.0, %v110
    %112 = vdwg.mxu0
    %v113 = vadd.f32 %v92, %v111
    %114 = vst [vmem:[#allocation2] sm:$0xff] %v113
    %v115 = vld [vmem:[#allocation3] sm:$0xff]
    %v116 = vand.u32 2147483647, %v72
    %v117 = vand.u32 2147483647, %v73
    %v118 = vand.u32 2147483647, %v74
    %v119 = vand.u32 2147483647, %v75
    %v120 = vand.u32 2147483647, %v76
    %v121 = vand.u32 2147483647, %v77
    %v122 = vand.u32 2147483647, %v78
    %v123 = vand.u32 2147483647, %v79
    %v124 = vand.u32 2147483647, %v80
    %v125 = vand.u32 2147483647, %v81
    %v126 = vand.u32 2147483647, %v82
    %v127 = vand.u32 2147483647, %v83
    %v128 = vand.u32 2147483647, %v84
    %v129 = vand.u32 2147483647, %v85
    %v130 = vand.u32 2147483647, %v86
    %v131 = vand.u32 2147483647, %v87
    %132 = vmatpush.msra.mxu0 %v131
    %133 = vmatpush.msra.mxu0 %v130
    %134 = vmatpush.msra.mxu0 %v129
    %135 = vmatpush.msra.mxu0 %v128
    %136 = vmatpush.msra.mxu0 %v127
    %137 = vmatpush.msra.mxu0 %v126
    %138 = vmatpush.msra.mxu0 %v125
    %139 = vmatpush.msra.mxu0 %v124
    %140 = vmatpush.msra.mxu0 %v123
    %141 = vmatpush.msra.mxu0 %v122
    %142 = vmatpush.msra.mxu0 %v121
    %143 = vmatpush.msra.mxu0 %v120
    %144 = vmatpush.msra.mxu0 %v119
    %145 = vmatpush.msra.mxu0 %v118
    %146 = vmatpush.msra.mxu0 %v117
    %147 = vmatpush.msra.mxu0 %v116
    %148 = vmatmul.f32.gmra.mxu0 %v91
    %v149 = vpop.f32.mrf.mxu0
    %v150 = vadd.f32 0.0, %v149
    %151 = vdwg.mxu0
    %v152 = vadd.f32 %v115, %v150
    %153 = vst [vmem:[#allocation3] sm:$0xff] %v152
    // Predicated region
    $region34: #{tpu_custom_call.1} parent=1 // pred_check
      %p154 = pneg %p64
    $region35: #{tpu_custom_call.1} parent=1 // pred_check_branch
      %156 = sbr.rel (%p154) target = $region37
    $region36: #{tpu_custom_call.1} parent=1 // pred_region
      %v157 = vld [vmem:[%s3] sm:$0x1]
      %v158 = vld [vmem:[#allocation2] sm:$0xff]
      %v159 = vld [vmem:[#allocation3] sm:$0xff]
      %v160 = vsub.f32 %v158, %v159
      %v162 = vperm.slane %v157, 0
      %v164 = vadd.f32 %v160, %v162
      %165 = vst [vmem:[#allocation10] sm:$0xff] %v164
      %v166 = vadd.f32 %v158, %v159
      %v167 = vadd.f32 %v166, %v162
      %168 = vst [vmem:[#allocation11] sm:$0xff] %v167
    $region37: #{tpu_custom_call.1} parent=1 // pred_fallthru
      _
    // Predicated region
    $region38: #{tpu_custom_call.1} parent=1 // pred_check
      _
    $region39: #{tpu_custom_call.1} parent=1 // pred_check_branch
      %170 = sbr.rel (0) target = $region41
    $region40: #{tpu_custom_call.1} parent=1 // pred_region
      %172 = vsyncadd [#allocation6], 0
      %s174 = sshll.u32 [#allocation10], 4
      %s175 = int_to_ptr.vmem [resolvable:$true] %s174
      %s176 = sshll.u32 %s4, 4
      %s177 = int_to_ptr.hbm [resolvable:$true] %s176
      %179 = dma.vmem_to_hbm [thread:$0]  %s175, 128, %s177, [#allocation6]
    $region41: #{tpu_custom_call.1} parent=1 // pred_fallthru
      _
    // Predicated region
    $region42: #{tpu_custom_call.1} parent=1 // pred_check
      _
    $region43: #{tpu_custom_call.1} parent=1 // pred_check_branch
      %181 = sbr.rel (0) target = $region45
    $region44: #{tpu_custom_call.1} parent=1 // pred_region
      %183 = vsyncadd [#allocation12], 0
      %s185 = sshll.u32 [#allocation11], 4
      %s186 = int_to_ptr.vmem [resolvable:$true] %s185
      %s187 = sshll.u32 %s5, 4
      %s188 = int_to_ptr.hbm [resolvable:$true] %s187
      %190 = dma.vmem_to_hbm [thread:$0]  %s186, 128, %s188, [#allocation12]
    $region45: #{tpu_custom_call.1} parent=1 // pred_fallthru
      _
    // Predicated region
    $region46: #{tpu_custom_call.1} parent=1 // pred_check
      _
    $region47: #{tpu_custom_call.1} parent=1 // pred_check_branch
      %192 = sbr.rel (0) target = $region49
    $region48: #{tpu_custom_call.1} parent=1 // pred_region
      %194 = dma.done [#allocation6], 128
    $region49: #{tpu_custom_call.1} parent=1 // pred_fallthru
      _
    // Predicated region
    $region50: #{tpu_custom_call.1} parent=1 // pred_check
      _
    $region51: #{tpu_custom_call.1} parent=1 // pred_check_branch
      %196 = sbr.rel (0) target = $region53
    $region52: #{tpu_custom_call.1} parent=1 // pred_region
      %198 = dma.done [#allocation12], 128
    $region53: #{tpu_custom_call.1} parent=1 // pred_fallthru
      _
    %199 = vsyncpa [#allocation5], 1
    %200 = vsyncpa [#allocation8], 1
    %201 = vsyncpa [#allocation6], 1
    %202 = vsyncpa [#allocation12], 1

</llo_original>
